<compile_context>
chip_gen: v6e
topology: v6e:2x2x1
jax: 0.10.0
libtpu: 0.0.40
codegen_flags: <defaults>
</compile_context>

<pallas_src>
import numpy as np
import jax
import jax.numpy as jnp
from jax.experimental import pallas as pl
from jax.experimental.pallas import tpu as pltpu


# --------------------------- static index buffer (== PyTorch __init__) --------
def _build_relative_position_index(window_size):
    wh, ww = window_size
    num_relative_distance = (2 * wh - 1) * (2 * ww - 1) + 3
    # torch.meshgrid default is "ij" indexing
    coords = np.stack(np.meshgrid(np.arange(wh), np.arange(ww), indexing="ij"))
    coords_flatten = coords.reshape(2, -1)                               # (2, L)
    rel = coords_flatten[:, :, None] - coords_flatten[:, None, :]        # (2, L, L)
    rel = rel.transpose(1, 2, 0).astype(np.int64).copy()                 # (L, L, 2)
    rel[:, :, 0] += wh - 1
    rel[:, :, 1] += ww - 1
    rel[:, :, 0] *= 2 * ww - 1
    L = wh * ww
    idx = np.zeros((L + 1, L + 1), dtype=np.int32)
    idx[1:, 1:] = rel.sum(-1)
    idx[0, 0:] = num_relative_distance - 3
    idx[0:, 0] = num_relative_distance - 2
    idx[0, 0] = num_relative_distance - 1
    return idx, num_relative_distance


# --------------------------------- Pallas kernel ------------------------------
def _rel_pos_bias_kernel(idx_ref, table_t_ref, o_ref):
    # idx_ref     : (1, NN)   int32   flattened relative_position_index
    # table_t_ref : (H, NRD)  float32 bias table, stored pre-transposed
    # o_ref       : (H, NN)   float32 lane-dense output (NN = N*N >= 128)
    nrd = table_t_ref.shape[1]
    nn = idx_ref.shape[1]
    row_ids = jax.lax.broadcasted_iota(jnp.int32, (nrd, nn), 0)
    onehot = (row_ids == idx_ref[...]).astype(jnp.float32)       # (NRD, NN)
    # gather-as-matmul on the MXU: (H, NRD) @ (NRD, NN) -> (H, NN)
    o_ref[...] = jnp.dot(table_t_ref[...], onehot,
                         preferred_element_type=jnp.float32)


# --------------------------------- parameters ---------------------------------
def make_params(key, window_size, num_heads):
    idx, nrd = _build_relative_position_index(window_size)
    # PyTorch parameter layout is (num_relative_distance, num_heads), init to
    # zeros in the reference; small random values here so the test is
    # non-trivial.  The transpose is hoisted out of the forward.
    table = 0.02 * jax.random.normal(key, (nrd, num_heads), jnp.float32)
    return {
        "relative_position_bias_table": table,        # reference layout (NRD, H)
        "table_t": jnp.asarray(table.T),              # (H, NRD) used by the kernel
        "relative_position_index": jnp.asarray(idx),  # (N, N) int32 buffer
    }


# ---------------------------------- forward -----------------------------------
def relative_position_bias_forward(params):
    table_t = params["table_t"]                 # (H, NRD)
    idx = params["relative_position_index"]     # (N, N)
    h, nrd = table_t.shape
    n = idx.shape[0]
    nn = n * n
    idx_flat = idx.reshape(1, nn).astype(jnp.int32)

    out = pl.pallas_call(
        _rel_pos_bias_kernel,
        out_shape=jax.ShapeDtypeStruct((h, nn), jnp.float32),
        grid=(1,),
        in_specs=[
            pl.BlockSpec((1, nn), lambda i: (0, 0)),
            pl.BlockSpec((h, nrd), lambda i: (0, 0)),
        ],
        out_specs=pl.BlockSpec((h, nn), lambda i: (0, 0)),
        compiler_params=pltpu.CompilerParams(
            dimension_semantics=("arbitrary",)),
    )(idx_flat, table_t)

    # contiguous reshape back to the PyTorch output layout (H, N, N)
    return out.reshape(h, n, n)


# ------------------------------------ main -------------------------------------
if __name__ == "__main__":
    WINDOW = (4, 4)        # window_size  -> N = 4*4 + 1 = 17 tokens
    HEADS = 8              # num_heads
    key = jax.random.PRNGKey(0)
    params = make_params(key, WINDOW, HEADS)

    bias = relative_position_bias_forward(params)
    jax.block_until_ready(bias)

    # pure-JAX reference of the PyTorch forward (gather + reshape + permute)
    table = params["relative_position_bias_table"]
    idx = params["relative_position_index"]
    N = WINDOW[0] * WINDOW[1] + 1
    ref = jnp.take(table, idx.reshape(-1), axis=0).reshape(N, N, HEADS)
    ref = jnp.transpose(ref, (2, 0, 1))

    assert bias.shape == (HEADS, N, N)
    assert bool(jnp.allclose(bias, ref, atol=1e-6, rtol=0)), "mismatch vs reference"
    print("KERNEL_OK")
</pallas_src>

<mosaic_0001>
module attributes {stable_mosaic.version = 11 : i64} {
  func.func @_rel_pos_bias_kernel(%arg0: i32, %arg1: memref<1x289xi32, #tpu.memory_space<vmem>>, %arg2: memref<8x52xf32, #tpu.memory_space<vmem>>, %arg3: memref<8x289xf32, #tpu.memory_space<vmem>>) attributes {dimension_semantics = [#tpu.dimension_semantics<arbitrary>], iteration_bounds = array<i64: 1>, scalar_prefetch = 0 : i64, scratch_operands = 0 : i64, tpu.core_type = #tpu.core_type<tc>, window_params = [{pipeline_mode = #tpu.pipeline_mode<synchronous>, transform_indices = @transform_0, window_bounds = array<i64: 1, 289>}, {pipeline_mode = #tpu.pipeline_mode<synchronous>, transform_indices = @transform_1, window_bounds = array<i64: 8, 52>}, {pipeline_mode = #tpu.pipeline_mode<synchronous>, transform_indices = @transform_2, window_bounds = array<i64: 8, 289>}]} {
    %0 = tpu.iota {dimensions = array<i32: 0>} : vector<52x289xi32>
    %c0 = arith.constant 0 : index
    %c0_0 = arith.constant 0 : index
    %1 = vector.load %arg1[%c0, %c0_0] : memref<1x289xi32, #tpu.memory_space<vmem>>, vector<1x289xi32>
    %2 = vector.broadcast %1 : vector<1x289xi32> to vector<52x289xi32>
    %3 = arith.cmpi eq, %0, %2 : vector<52x289xi32>
    %4 = arith.extui %3 : vector<52x289xi1> to vector<52x289xi32>
    %5 = arith.sitofp %4 : vector<52x289xi32> to vector<52x289xf32>
    %c0_1 = arith.constant 0 : index
    %c0_2 = arith.constant 0 : index
    %6 = vector.load %arg2[%c0_1, %c0_2] : memref<8x52xf32, #tpu.memory_space<vmem>>, vector<8x52xf32>
    %cst = arith.constant dense<0.000000e+00> : vector<8x289xf32>
    %7 = tpu.matmul %6, %5, %cst {dimension_numbers = #tpu.dot_dimension_numbers<[1], [0], [0], [1], [0, 0, 1, 1], [], []>} : vector<8x52xf32>, vector<52x289xf32>, vector<8x289xf32> -> vector<8x289xf32>
    %c0_3 = arith.constant 0 : index
    %c0_4 = arith.constant 0 : index
    %8 = vector.load %arg3[%c0_3, %c0_4] : memref<8x289xf32, #tpu.memory_space<vmem>>, vector<8x289xf32>
    tpu.vector_store %arg3[%c0_3, %c0_4], %7 {strides = array<i32>} : memref<8x289xf32, #tpu.memory_space<vmem>>, vector<8x289xf32>,
    return
  }
  func.func @transform_0(%arg0: i32) -> (i32, i32) {
    %c0_i32 = arith.constant 0 : i32
    %c0_i32_0 = arith.constant 0 : i32
    %c0_i32_1 = arith.constant 0 : i32
    return %c0_i32, %c0_i32_0 : i32, i32
  }
  func.func @transform_1(%arg0: i32) -> (i32, i32) {
    %c0_i32 = arith.constant 0 : i32
    %c0_i32_0 = arith.constant 0 : i32
    %c0_i32_1 = arith.constant 0 : i32
    return %c0_i32, %c0_i32_0 : i32, i32
  }
  func.func @transform_2(%arg0: i32) -> (i32, i32) {
    %c0_i32 = arith.constant 0 : i32
    %c0_i32_0 = arith.constant 0 : i32
    %c0_i32_1 = arith.constant 0 : i32
    return %c0_i32, %c0_i32_0 : i32, i32
  }
}

</mosaic_0001>

<llo_original>
// kernel: tpu_custom_call.1
$region0: #{tpu_custom_call.1}
  #allocation0 [shape = 'u32[]', space=smem, size = 0x4, offset = 0x4, fixed_abs, tag = 'smem constant byte address 0x4 - core index']
  #allocation1 [shape = 'u32[144,128]{1,0:T(1,128)}', space=vmem, size = 0x12000, scoped, tag = 'internal scratch']
  %s0 = inlined_call_operand.hbm [shape: s32[1,289], index: 0, kind: input, shape index: {}]
  %s1 = inlined_call_operand.hbm [shape: f32[8,52], index: 1, kind: input, shape index: {}]
  %s2 = inlined_call_operand.hbm [shape: f32[8,289], index: 2, kind: output, shape index: {}]
  %s3 = sld [smem:[#allocation0]]
  $region26: #{tpu_custom_call.1} parent=0
    _
  %s5 = ssub.s32 1, %s3
  %s6 = scalar_select 0, %s5, %s3
  $region1: #{tpu_custom_call.1} parent=0
    #allocation2 [shape = 'u8[1536]{0}', space=vmem, size = 0x800, scoped, tag = 'input window, operand 0, single buffered']
    #allocation3 [shape = 's32[1]{0}', space=sflag, size = 0x4, scoped, tag = 'scoped memory for tpu_custom_call.1']
    #allocation4 [shape = 's32[1]{0}', space=sflag, size = 0x4, scoped, tag = 'scoped memory for tpu_custom_call.1']
    #allocation5 [shape = 'u8[4096]{0}', space=vmem, size = 0x1000, scoped, tag = 'input window, operand 1, single buffered']
    #allocation6 [shape = 's32[1]{0}', space=sflag, size = 0x4, scoped, tag = 'scoped memory for tpu_custom_call.1']
    #allocation7 [shape = 'u8[12288]{0}', space=vmem, size = 0x3000, scoped, tag = 'output window, operand 0, single buffered']
    %7 = vsyncpa [#allocation3], 0
    %8 = vsyncpa [#allocation6], 0
    %9 = vsyncpa [#allocation4], 0
    // Predicated region
    $region2: #{tpu_custom_call.1} parent=1 // pred_check
      _
    $region3: #{tpu_custom_call.1} parent=1 // pred_check_branch
      %11 = sbr.rel (0) target = $region5
    $region4: #{tpu_custom_call.1} parent=1 // pred_region
      %s13 = ssub.s32 48, 48
      %14 = vsyncadd [#allocation3], %s13
      %s16 = sshll.u32 [#allocation2], 4
      %s17 = int_to_ptr.vmem [resolvable:$true] %s16
      %19 = dma.hbm_to_vmem [thread:$0]  %s0, 48, %s17, [#allocation3]
    $region5: #{tpu_custom_call.1} parent=1 // pred_fallthru
      _
    // Predicated region
    $region6: #{tpu_custom_call.1} parent=1 // pred_check
      _
    $region7: #{tpu_custom_call.1} parent=1 // pred_check_branch
      %21 = sbr.rel (0) target = $region9
    $region8: #{tpu_custom_call.1} parent=1 // pred_region
      %s23 = ssub.s32 128, 128
      %24 = vsyncadd [#allocation6], %s23
      %s26 = sshll.u32 [#allocation5], 4
      %s27 = int_to_ptr.vmem [resolvable:$true] %s26
      %29 = dma.hbm_to_vmem [thread:$0]  %s1, 128, %s27, [#allocation6]
    $region9: #{tpu_custom_call.1} parent=1 // pred_fallthru
      _
    // Predicated region
    $region10: #{tpu_custom_call.1} parent=1 // pred_check
      _
    $region11: #{tpu_custom_call.1} parent=1 // pred_check_branch
      %31 = sbr.rel (0) target = $region13
    $region12: #{tpu_custom_call.1} parent=1 // pred_region
      %32 = dma.done [#allocation3], 48
    $region13: #{tpu_custom_call.1} parent=1 // pred_fallthru
      _
    // Predicated region
    $region14: #{tpu_custom_call.1} parent=1 // pred_check
      _
    $region15: #{tpu_custom_call.1} parent=1 // pred_check_branch
      %34 = sbr.rel (0) target = $region17
    $region16: #{tpu_custom_call.1} parent=1 // pred_region
      %35 = dma.done [#allocation6], 128
    $region17: #{tpu_custom_call.1} parent=1 // pred_fallthru
      _
    %v36 = vlaneseq
    %v37 = vshrl.u32 %v36, 7
    %v38 = vadd.s32 %v37, 8
    %v39 = vadd.s32 %v37, 16
    %v40 = vadd.s32 %v37, 24
    %v41 = vadd.s32 %v37, 32
    %v42 = vadd.s32 %v37, 40
    %v43 = vadd.s32 %v37, 48
    %v44 = vld [vmem:[#allocation2] sm:$0x7]
    %v45 = vlaneseq
    %v46 = vshrl.u32 %v45, 7
    %v47 = vsub.s32 0, %v46
    %v48 = vrot.slane %v44, %v47
    %v49 = vlaneseq
    %v50 = vshrl.u32 %v49, 7
    %v51 = vsub.s32 1, %v50
    %v52 = vrot.slane %v44, %v51
    %v53 = vlaneseq
    %v54 = vshrl.u32 %v53, 7
    %v55 = vsub.s32 2, %v54
    %v56 = vrot.slane %v44, %v55
    %vm57 = vcmp.eq.s32.totalorder %v37, %v48
    %vm58 = vcmp.eq.s32.totalorder %v37, %v52
    %vm59 = vcmp.eq.s32.totalorder %v37, %v56
    %vm60 = vcmp.eq.s32.totalorder %v38, %v48
    %vm61 = vcmp.eq.s32.totalorder %v38, %v52
    %vm62 = vcmp.eq.s32.totalorder %v38, %v56
    %vm63 = vcmp.eq.s32.totalorder %v39, %v48
    %vm64 = vcmp.eq.s32.totalorder %v39, %v52
    %vm65 = vcmp.eq.s32.totalorder %v39, %v56
    %vm66 = vcmp.eq.s32.totalorder %v40, %v48
    %vm67 = vcmp.eq.s32.totalorder %v40, %v52
    %vm68 = vcmp.eq.s32.totalorder %v40, %v56
    %vm69 = vcmp.eq.s32.totalorder %v41, %v48
    %vm70 = vcmp.eq.s32.totalorder %v41, %v52
    %vm71 = vcmp.eq.s32.totalorder %v41, %v56
    %vm72 = vcmp.eq.s32.totalorder %v42, %v48
    %vm73 = vcmp.eq.s32.totalorder %v42, %v52
    %vm74 = vcmp.eq.s32.totalorder %v42, %v56
    %vm75 = vcmp.eq.s32.totalorder %v43, %v48
    %vm76 = vcmp.eq.s32.totalorder %v43, %v52
    %vm77 = vcmp.eq.s32.totalorder %v43, %v56
    %v78 = vsel %vm57, 1, 0
    %v79 = vsel %vm58, 1, 0
    %v80 = vsel %vm59, 1, 0
    %v81 = vsel %vm60, 1, 0
    %v82 = vsel %vm61, 1, 0
    %v83 = vsel %vm62, 1, 0
    %v84 = vsel %vm63, 1, 0
    %v85 = vsel %vm64, 1, 0
    %v86 = vsel %vm65, 1, 0
    %v87 = vsel %vm66, 1, 0
    %v88 = vsel %vm67, 1, 0
    %v89 = vsel %vm68, 1, 0
    %v90 = vsel %vm69, 1, 0
    %v91 = vsel %vm70, 1, 0
    %v92 = vsel %vm71, 1, 0
    %v93 = vsel %vm72, 1, 0
    %v94 = vsel %vm73, 1, 0
    %v95 = vsel %vm74, 1, 0
    %v96 = vsel %vm75, 1, 0
    %v97 = vsel %vm76, 1, 0
    %v98 = vsel %vm77, 1, 0
    %v99 = vcvt.s32.f32 %v78
    %v100 = vcvt.s32.f32 %v79
    %v101 = vcvt.s32.f32 %v80
    %v102 = vcvt.s32.f32 %v81
    %v103 = vcvt.s32.f32 %v82
    %v104 = vcvt.s32.f32 %v83
    %v105 = vcvt.s32.f32 %v84
    %v106 = vcvt.s32.f32 %v85
    %v107 = vcvt.s32.f32 %v86
    %v108 = vcvt.s32.f32 %v87
    %v109 = vcvt.s32.f32 %v88
    %v110 = vcvt.s32.f32 %v89
    %v111 = vcvt.s32.f32 %v90
    %v112 = vcvt.s32.f32 %v91
    %v113 = vcvt.s32.f32 %v92
    %v114 = vcvt.s32.f32 %v93
    %v115 = vcvt.s32.f32 %v94
    %v116 = vcvt.s32.f32 %v95
    %v117 = vcvt.s32.f32 %v96
    %v118 = vcvt.s32.f32 %v97
    %v119 = vcvt.s32.f32 %v98
    %v120 = vld [vmem:[#allocation5] sm:$0xff]
    %vm121 = vcmask 424960
    %v123 = vsel %vm121, %v120, 0
    %vm125 = vcmask 1043456
    %v127 = vsel %vm125, %v117, 0
    %v130 = vsel %vm125, %v118, 0
    %v133 = vsel %vm125, %v119, 0
    %135 = vmatprep.subr.mxu0 0.0
    %136 = vmatpush1.msra.mxu0 0.0
    %137 = vmatprep.subr.mxu0 0.0
    %138 = vmatpush1.msra.mxu0 0.0
    %139 = vmatprep.subr.mxu0 0.0
    %140 = vmatpush1.msra.mxu0 0.0
    %141 = vmatprep.subr.mxu0 0.0
    %142 = vmatpush1.msra.mxu0 0.0
    %143 = vmatprep.subr.mxu0 0.0
    %144 = vmatpush1.msra.mxu0 0.0
    %145 = vmatprep.subr.mxu0 0.0
    %146 = vmatpush1.msra.mxu0 0.0
    %147 = vmatprep.subr.mxu0 0.0
    %148 = vmatpush1.msra.mxu0 0.0
    %149 = vmatprep.subr.mxu0 0.0
    %150 = vmatpush1.msra.mxu0 0.0
    %151 = vmatprep.subr.mxu0 0.0
    %152 = vmatpush1.msra.mxu0 0.0
    %153 = vmatprep.subr.mxu0 %v130
    %154 = vmatpush1.msra.mxu0 %v127
    %155 = vmatprep.subr.mxu0 %v115
    %156 = vmatpush1.msra.mxu0 %v114
    %157 = vmatprep.subr.mxu0 %v112
    %158 = vmatpush1.msra.mxu0 %v111
    %159 = vmatprep.subr.mxu0 %v109
    %160 = vmatpush1.msra.mxu0 %v108
    %161 = vmatprep.subr.mxu0 %v106
    %162 = vmatpush1.msra.mxu0 %v105
    %163 = vmatprep.subr.mxu0 %v103
    %164 = vmatpush1.msra.mxu0 %v102
    %165 = vmatprep.subr.mxu0 %v100
    %166 = vmatpush1.msra.mxu0 %v99
    %167 = vmatprep.subr.mxu0 0.0
    %168 = vmatpush2.msra.mxu0 0.0
    %169 = vmatprep.subr.mxu0 0.0
    %170 = vmatpush2.msra.mxu0 0.0
    %171 = vmatprep.subr.mxu0 0.0
    %172 = vmatpush2.msra.mxu0 0.0
    %173 = vmatprep.subr.mxu0 0.0
    %174 = vmatpush2.msra.mxu0 0.0
    %175 = vmatprep.subr.mxu0 0.0
    %176 = vmatpush2.msra.mxu0 0.0
    %177 = vmatprep.subr.mxu0 0.0
    %178 = vmatpush2.msra.mxu0 0.0
    %179 = vmatprep.subr.mxu0 0.0
    %180 = vmatpush2.msra.mxu0 0.0
    %181 = vmatprep.subr.mxu0 0.0
    %182 = vmatpush2.msra.mxu0 0.0
    %183 = vmatprep.subr.mxu0 0.0
    %184 = vmatpush2.msra.mxu0 0.0
    %185 = vmatprep.subr.mxu0 0.0
    %186 = vmatpush2.msra.mxu0 0.0
    %187 = vmatprep.subr.mxu0 0.0
    %188 = vmatpush2.msra.mxu0 0.0
    %189 = vmatprep.subr.mxu0 0.0
    %190 = vmatpush2.msra.mxu0 0.0
    %191 = vmatprep.subr.mxu0 0.0
    %192 = vmatpush2.msra.mxu0 0.0
    %193 = vmatprep.subr.mxu0 0.0
    %194 = vmatpush2.msra.mxu0 0.0
    %195 = vmatprep.subr.mxu0 0.0
    %196 = vmatpush2.msra.mxu0 0.0
    %197 = vmatprep.subr.mxu0 0.0
    %198 = vmatpush2.msra.mxu0 0.0
    %199 = vmatprep.mubr.f32.mxu0 0.0
    %200 = vmatmul.mubr.f32.gmra.mxu0 %v123
    %v201 = vpop.f32.mrf.mxu0
    %v202 = vadd.f32 0.0, %v201
    %v203 = vpop.f32.mrf.mxu0
    %v204 = vadd.f32 0.0, %v203
    %205 = vdwg.mxu0
    %206 = vmatprep.subr.mxu0 0.0
    %207 = vmatpush1.msra.mxu0 0.0
    %208 = vmatprep.subr.mxu0 0.0
    %209 = vmatpush1.msra.mxu0 0.0
    %210 = vmatprep.subr.mxu0 0.0
    %211 = vmatpush1.msra.mxu0 0.0
    %212 = vmatprep.subr.mxu0 0.0
    %213 = vmatpush1.msra.mxu0 0.0
    %214 = vmatprep.subr.mxu0 0.0
    %215 = vmatpush1.msra.mxu0 0.0
    %216 = vmatprep.subr.mxu0 0.0
    %217 = vmatpush1.msra.mxu0 0.0
    %218 = vmatprep.subr.mxu0 0.0
    %219 = vmatpush1.msra.mxu0 0.0
    %220 = vmatprep.subr.mxu0 0.0
    %221 = vmatpush1.msra.mxu0 0.0
    %222 = vmatprep.subr.mxu0 0.0
    %223 = vmatpush1.msra.mxu0 0.0
    %224 = vmatprep.subr.mxu0 0.0
    %225 = vmatpush1.msra.mxu0 %v133
    %226 = vmatprep.subr.mxu0 0.0
    %227 = vmatpush1.msra.mxu0 %v116
    %228 = vmatprep.subr.mxu0 0.0
    %229 = vmatpush1.msra.mxu0 %v113
    %230 = vmatprep.subr.mxu0 0.0
    %231 = vmatpush1.msra.mxu0 %v110
    %232 = vmatprep.subr.mxu0 0.0
    %233 = vmatpush1.msra.mxu0 %v107
    %234 = vmatprep.subr.mxu0 0.0
    %235 = vmatpush1.msra.mxu0 %v104
    %236 = vmatprep.subr.mxu0 0.0
    %237 = vmatpush1.msra.mxu0 %v101
    %238 = vmatprep.subr.mxu0 0.0
    %239 = vmatpush2.msra.mxu0 0.0
    %240 = vmatprep.subr.mxu0 0.0
    %241 = vmatpush2.msra.mxu0 0.0
    %242 = vmatprep.subr.mxu0 0.0
    %243 = vmatpush2.msra.mxu0 0.0
    %244 = vmatprep.subr.mxu0 0.0
    %245 = vmatpush2.msra.mxu0 0.0
    %246 = vmatprep.subr.mxu0 0.0
    %247 = vmatpush2.msra.mxu0 0.0
    %248 = vmatprep.subr.mxu0 0.0
    %249 = vmatpush2.msra.mxu0 0.0
    %250 = vmatprep.subr.mxu0 0.0
    %251 = vmatpush2.msra.mxu0 0.0
    %252 = vmatprep.subr.mxu0 0.0
    %253 = vmatpush2.msra.mxu0 0.0
    %254 = vmatprep.subr.mxu0 0.0
    %255 = vmatpush2.msra.mxu0 0.0
    %256 = vmatprep.subr.mxu0 0.0
    %257 = vmatpush2.msra.mxu0 0.0
    %258 = vmatprep.subr.mxu0 0.0
    %259 = vmatpush2.msra.mxu0 0.0
    %260 = vmatprep.subr.mxu0 0.0
    %261 = vmatpush2.msra.mxu0 0.0
    %262 = vmatprep.subr.mxu0 0.0
    %263 = vmatpush2.msra.mxu0 0.0
    %264 = vmatprep.subr.mxu0 0.0
    %265 = vmatpush2.msra.mxu0 0.0
    %266 = vmatprep.subr.mxu0 0.0
    %267 = vmatpush2.msra.mxu0 0.0
    %268 = vmatprep.subr.mxu0 0.0
    %269 = vmatpush2.msra.mxu0 0.0
    %270 = vmatprep.mubr.f32.mxu0 0.0
    %271 = vmatmul.mubr.f32.gmra.mxu0 %v123
    %v272 = vpop.f32.mrf.mxu0
    %v273 = vadd.f32 0.0, %v272
    %v274 = vpop.f32.mrf.mxu0
    %275 = vdwg.mxu0
    %276 = vst [vmem:[#allocation7] sm:$0xff] %v202
    %277 = vst [vmem:[#allocation7 + $0x8] sm:$0xff] %v204
    %vm278 = vcmask 269312
    %279 = vst.msk [vmem:[#allocation7 + $0x10] sm:$0xff] %vm278, %v273
    // Predicated region
    $region18: #{tpu_custom_call.1} parent=1 // pred_check
      _
    $region19: #{tpu_custom_call.1} parent=1 // pred_check_branch
      %281 = sbr.rel (0) target = $region21
    $region20: #{tpu_custom_call.1} parent=1 // pred_region
      %s283 = ssub.s32 384, 384
      %284 = vsyncadd [#allocation4], %s283
      %s286 = sshll.u32 [#allocation7], 4
      %s287 = int_to_ptr.vmem [resolvable:$true] %s286
      %289 = dma.vmem_to_hbm [thread:$0]  %s287, 384, %s2, [#allocation4]
    $region21: #{tpu_custom_call.1} parent=1 // pred_fallthru
      _
    // Predicated region
    $region22: #{tpu_custom_call.1} parent=1 // pred_check
      _
    $region23: #{tpu_custom_call.1} parent=1 // pred_check_branch
      %291 = sbr.rel (0) target = $region25
    $region24: #{tpu_custom_call.1} parent=1 // pred_region
      %292 = dma.done [#allocation4], 384
    $region25: #{tpu_custom_call.1} parent=1 // pred_fallthru
      _
    %293 = vsyncpa [#allocation3], 1
    %294 = vsyncpa [#allocation6], 1
    %295 = vsyncpa [#allocation4], 1

</llo_original>
